<compile_context>
chip_gen: v7x
topology: tpu7x:2x2x1
jax: 0.10.0
libtpu: 0.0.40
codegen_flags: <defaults>
</compile_context>

<pallas_src>
import math
import jax
import jax.numpy as jnp
from jax.experimental import pallas as pl
from jax.experimental.pallas import tpu as pltpu


def _round_up(v, m):
    return (v + m - 1) // m * m


def _vmem_capacity_bytes():
    """Per-core VMEM capacity; conservative 64 MiB (v7x) if the query fails."""
    try:
        info = pltpu.get_tpu_info()
        cap = getattr(info, "vmem_capacity_bytes", None)
        if cap:
            return int(cap)
    except Exception:
        pass
    return 64 << 20


def _ffn_kernel_accout(x_ref, w1_ref, b1_ref, w2_ref, b2_ref, o_ref):
    # f32-output variant: o_ref's block index is constant over k, so it stays
    # VMEM-resident across the k axis and doubles as the f32 accumulator.
    # x_ref : (tm, d_pad)  original dtype   w1_ref: (d_pad, tk)  compute dtype
    # b1_ref: (nk, tk) f32 (resident)       w2_ref: (tk, d_pad)  compute dtype
    # b2_ref: (1, d_pad) f32 (resident)     o_ref : (tm, d_pad)  f32
    k = pl.program_id(1)

    @pl.when(k == 0)
    def _():
        o_ref[...] = jnp.zeros_like(o_ref)

    # In-kernel cast of x rides the VPU while the MXU runs; Dropout(p=0.1) is
    # identity in eval mode.
    xv = x_ref[...].astype(w1_ref.dtype)
    h = jnp.dot(xv, w1_ref[...], preferred_element_type=jnp.float32)
    h = jnp.maximum(h + b1_ref[pl.ds(k, 1), :], 0.0)
    o_ref[...] += jnp.dot(h.astype(w2_ref.dtype), w2_ref[...],
                          preferred_element_type=jnp.float32)

    @pl.when(k == pl.num_programs(1) - 1)
    def _():
        o_ref[...] += b2_ref[...]


def _ffn_kernel_scratch(x_ref, w1_ref, b1_ref, w2_ref, b2_ref, o_ref, acc_ref):
    # Non-f32-output variant: accumulate in an f32 VMEM scratch, cast on finalize.
    k = pl.program_id(1)

    @pl.when(k == 0)
    def _():
        acc_ref[...] = jnp.zeros_like(acc_ref)

    xv = x_ref[...].astype(w1_ref.dtype)
    h = jnp.dot(xv, w1_ref[...], preferred_element_type=jnp.float32)
    h = jnp.maximum(h + b1_ref[pl.ds(k, 1), :], 0.0)
    acc_ref[...] += jnp.dot(h.astype(w2_ref.dtype), w2_ref[...],
                            preferred_element_type=jnp.float32)

    @pl.when(k == pl.num_programs(1) - 1)
    def _():
        o_ref[...] = (acc_ref[...] + b2_ref[...]).astype(o_ref.dtype)


def feed_forward(x, w1_t, b1, w2_t, b2, *, tm=None, tk=None, compute_dtype=None):
    """out = relu(x @ w1_t + b1) @ w2_t + b2 for x: [batch, seq, d_model]."""
    batch, seq, d_model = x.shape
    middle = w1_t.shape[1]
    N = batch * seq
    out_dtype = jnp.dtype(x.dtype)
    cdtype = jnp.dtype(compute_dtype) if compute_dtype is not None else jnp.dtype(x.dtype)

    isz = cdtype.itemsize
    x_isz = jnp.dtype(x.dtype).itemsize
    out_isz = out_dtype.itemsize
    out_is_f32 = out_dtype == jnp.float32

    # Lane-dense feature dims (multiples of 128) -> unmasked vector stores.
    d_pad = _round_up(d_model, 128)
    m_pad0 = _round_up(middle, 128)

    # Sublane alignment for the row tile depends on the narrowest dtype tiled
    # along sublanes (f32 -> 8, bf16 -> 16, 8-bit -> 32).
    sub_align = 32 // min(x_isz, out_isz)

    # VMEM budget: real capacity minus compiler headroom (~48 MiB on v7x,
    # ~96 MiB on v5e/v6e), then size tiles to ~85% of it.
    cap = _vmem_capacity_bytes()
    budget = max(min(int(cap * 0.75), cap - (8 << 20)), 32 << 20)
    usable = int(budget * 0.85)

    def _need(tm_, tk_, m_pad_):
        n = 2 * tm_ * d_pad * x_isz            # x tile (double-buffered)
        n += 2 * tm_ * d_pad * out_isz         # output tile
        n += 2 * d_pad * tk_ * isz             # W1 chunk
        n += 2 * tk_ * d_pad * isz             # W2 chunk
        n += 2 * (m_pad_ + d_pad) * 4          # resident biases (tiny)
        if not out_is_f32:
            n += tm_ * d_pad * 4               # f32 accumulator scratch
        n += tm_ * tk_ * 4 + tm_ * d_pad * isz  # h temporary + in-kernel x cast
        return n

    # --- tk / m_pad selection ------------------------------------------------
    if tk is not None:
        tk = max(128, _round_up(tk, 128))
        m_pad = _round_up(m_pad0, tk)
    else:
        # Weight-stationary fast path: full padded weights resident in VMEM
        # (counted at 2x for buffer allocation), leaving >= half the budget for
        # the row tiles. Then the k grid has a single step and the weight
        # blocks are DMA'd exactly once.
        if 2 * (2 * d_pad * m_pad0 * isz) <= usable // 2:
            tk = m_pad0
            m_pad = m_pad0
        else:
            # Streaming: prefer MXU-aligned 512 then 256 (v6e/v7x 256-wide MXU;
            # also fine on v5e's 128-wide MXU); pad m_pad up to a tk multiple.
            tk = 128
            for cand in (512, 256):
                if 2 * (2 * d_pad * cand * isz) <= usable // 2:
                    tk = cand
                    break
            m_pad = _round_up(m_pad0, tk)

    # --- tm selection (VMEM-budgeted, up to 1024) -----------------------------
    if tm is None:
        tm_cands = [c for c in (1024, 512, 256, 128, 64, 32, 16, 8)
                    if c % sub_align == 0]
        tm = next((c for c in tm_cands if _need(c, tk, m_pad) <= usable), sub_align)
        # Megacore: keep >= 2 parallel row tiles when N allows (v7x: 2 TCs).
        while tm > sub_align and _round_up(N, tm) // tm < 2:
            tm //= 2
    else:
        tm = max(sub_align, _round_up(tm, sub_align))
    tm = max(sub_align, min(tm, _round_up(N, sub_align)))
    tm = _round_up(tm, sub_align)
    n_pad = _round_up(N, tm)

    grid = (n_pad // tm, m_pad // tk)
    ni, nk = grid

    # Zero-padding is exact: padded input features / hidden units contribute 0,
    # padded output features / rows are sliced off below.
    x2d = jnp.pad(x.reshape(N, d_model),
                  ((0, n_pad - N), (0, d_pad - d_model)))          # kept in x.dtype
    w1p = jnp.pad(w1_t, ((0, d_pad - d_model), (0, m_pad - middle))).astype(cdtype)
    w2p = jnp.pad(w2_t, ((0, m_pad - middle), (0, d_pad - d_model))).astype(cdtype)
    b1p = jnp.pad(b1.astype(jnp.float32), (0, m_pad - middle)).reshape(nk, tk)
    b2p = jnp.pad(b2.astype(jnp.float32), (0, d_pad - d_model)).reshape(1, d_pad)

    need = _need(tm, tk, m_pad)
    vmem_limit = int(min(max(int(need * 1.25), 32 << 20), budget))

    weight_passes = 1 if nk == 1 else ni
    cost = pl.CostEstimate(
        flops=int(4 * n_pad * d_pad * m_pad),  # two matmuls, 2 flops per MAC
        transcendentals=0,
        bytes_accessed=int(n_pad * d_pad * (x_isz + out_isz)
                           + weight_passes * 2 * d_pad * m_pad * isz
                           + (m_pad + d_pad) * 4),
    )

    if out_is_f32:
        kernel = _ffn_kernel_accout
        scratch_shapes = []
    else:
        kernel = _ffn_kernel_scratch
        scratch_shapes = [pltpu.VMEM((tm, d_pad), jnp.float32)]

    out2d = pl.pallas_call(
        kernel,
        out_shape=jax.ShapeDtypeStruct((n_pad, d_pad), out_dtype),
        grid_spec=pltpu.PrefetchScalarGridSpec(
            num_scalar_prefetch=0,
            grid=grid,
            in_specs=[
                pl.BlockSpec((tm, d_pad), lambda i, k: (i, 0)),   # x rows (const over k)
                pl.BlockSpec((d_pad, tk), lambda i, k: (0, k)),   # W1^T chunk (resident if nk==1)
                pl.BlockSpec((nk, tk),    lambda i, k: (0, 0)),   # b1 (fully resident)
                pl.BlockSpec((tk, d_pad), lambda i, k: (k, 0)),   # W2^T chunk
                pl.BlockSpec((1, d_pad),  lambda i, k: (0, 0)),   # b2 (resident)
            ],
            out_specs=pl.BlockSpec((tm, d_pad), lambda i, k: (i, 0)),
            scratch_shapes=scratch_shapes,
        ),
        compiler_params=pltpu.CompilerParams(
            dimension_semantics=("parallel", "arbitrary"),
            vmem_limit_bytes=vmem_limit),
        cost_estimate=cost,
    )(x2d, w1p, b1p, w2p, b2p)

    return out2d[:N, :d_model].reshape(batch, seq, d_model)


def init_params(key, d_model, middle_dim, dtype=jnp.float32):
    """Deterministic init mimicking nn.Linear default (uniform +/- 1/sqrt(fan_in))."""
    k1, k2, k3, k4 = jax.random.split(key, 4)
    bound1 = 1.0 / math.sqrt(d_model)
    bound2 = 1.0 / math.sqrt(middle_dim)
    # PyTorch stores W1: (middle, d_model); we keep the transposed layout for the kernel.
    w1_t = jax.random.uniform(k1, (d_model, middle_dim), dtype, -bound1, bound1)
    b1 = jax.random.uniform(k2, (middle_dim,), dtype, -bound1, bound1)
    w2_t = jax.random.uniform(k3, (middle_dim, d_model), dtype, -bound2, bound2)
    b2 = jax.random.uniform(k4, (d_model,), dtype, -bound2, bound2)
    return w1_t, b1, w2_t, b2


def _reference(x, w1_t, b1, w2_t, b2):
    n = x.shape[0] * x.shape[1]
    h = jnp.maximum(x.reshape(n, -1).astype(jnp.float32) @ w1_t.astype(jnp.float32)
                    + b1.astype(jnp.float32), 0.0)
    return (h @ w2_t.astype(jnp.float32) + b2.astype(jnp.float32)).reshape(x.shape)


if __name__ == "__main__":
    key = jax.random.PRNGKey(0)
    kx, kp, kp2 = jax.random.split(key, 3)

    batch, seq, d_model, middle_dim = 2, 8, 32, 64
    x = jax.random.normal(kx, (batch, seq, d_model), jnp.float32)
    w1_t, b1, w2_t, b2 = init_params(kp, d_model, middle_dim)
    ref = _reference(x, w1_t, b1, w2_t, b2)

    # 1) f32 path (weight-stationary fast path; matches PyTorch numerics).
    out = jax.block_until_ready(feed_forward(x, w1_t, b1, w2_t, b2))
    assert out.shape == (batch, seq, d_model)
    assert jnp.allclose(out, ref, atol=1e-5, rtol=1e-5)

    # 2) bf16 weights/activations (cast in-kernel), f32 accumulation/output.
    out_bf16 = jax.block_until_ready(
        feed_forward(x, w1_t, b1, w2_t, b2, compute_dtype=jnp.bfloat16))
    assert out_bf16.shape == (batch, seq, d_model)
    assert jnp.allclose(out_bf16, ref, atol=1e-1, rtol=1e-1)

    # 3) Hidden-dim streaming path (nk > 1): middle=320 with an explicit tk=128.
    middle2 = 320
    w1b, b1b, w2b, b2b = init_params(kp2, d_model, middle2)
    ref2 = _reference(x, w1b, b1b, w2b, b2b)
    out2 = jax.block_until_ready(feed_forward(x, w1b, b1b, w2b, b2b, tk=128))
    assert out2.shape == (batch, seq, d_model)
    assert jnp.allclose(out2, ref2, atol=1e-5, rtol=1e-5)

    # 4) bf16 input/output path (exercises the f32-scratch kernel variant).
    x_bf = x.astype(jnp.bfloat16)
    out_bf = jax.block_until_ready(
        feed_forward(x_bf, w1_t.astype(jnp.bfloat16), b1.astype(jnp.bfloat16),
                     w2_t.astype(jnp.bfloat16), b2.astype(jnp.bfloat16)))
    assert out_bf.shape == (batch, seq, d_model)
    assert jnp.allclose(out_bf.astype(jnp.float32), ref, atol=1.5e-1, rtol=1.5e-1)

    print("KERNEL_OK")
</pallas_src>

<mosaic_0001>
module attributes {stable_mosaic.version = 11 : i64} {
  func.func @_ffn_kernel_accout(%arg0: i32, %arg1: i32, %arg2: memref<8x128xf32, #tpu.memory_space<vmem>>, %arg3: memref<128x128xf32, #tpu.memory_space<vmem>>, %arg4: memref<1x128xf32, #tpu.memory_space<vmem>>, %arg5: memref<128x128xf32, #tpu.memory_space<vmem>>, %arg6: memref<1x128xf32, #tpu.memory_space<vmem>>, %arg7: memref<8x128xf32, #tpu.memory_space<vmem>>) attributes {dimension_semantics = [#tpu.dimension_semantics<parallel>, #tpu.dimension_semantics<arbitrary>], iteration_bounds = array<i64: 2, 1>, scalar_prefetch = 0 : i64, scratch_operands = 0 : i64, tpu.core_type = #tpu.core_type<tc>, window_params = [{transform_indices = @transform_0, window_bounds = array<i64: 8, 128>}, {transform_indices = @transform_1, window_bounds = array<i64: 128, 128>}, {pipeline_mode = #tpu.pipeline_mode<synchronous>, transform_indices = @transform_2, window_bounds = array<i64: 1, 128>}, {transform_indices = @transform_3, window_bounds = array<i64: 128, 128>}, {pipeline_mode = #tpu.pipeline_mode<synchronous>, transform_indices = @transform_4, window_bounds = array<i64: 1, 128>}, {transform_indices = @transform_5, window_bounds = array<i64: 8, 128>}]} {
    %c0_i32 = arith.constant 0 : i32
    %0 = arith.cmpi eq, %arg1, %c0_i32 : i32
    %1 = arith.extui %0 : i1 to i32
    %c0_i32_0 = arith.constant 0 : i32
    %2 = arith.cmpi ne, %1, %c0_i32_0 : i32
    scf.if %2 {
      %cst_15 = arith.constant 0.000000e+00 : f32
      %20 = vector.broadcast %cst_15 : f32 to vector<8x128xf32>
      %c0_16 = arith.constant 0 : index
      %c0_17 = arith.constant 0 : index
      %21 = vector.load %arg7[%c0_16, %c0_17] : memref<8x128xf32, #tpu.memory_space<vmem>>, vector<8x128xf32>
      tpu.vector_store %arg7[%c0_16, %c0_17], %20 {strides = array<i32>} : memref<8x128xf32, #tpu.memory_space<vmem>>, vector<8x128xf32>,
    } else {
    }
    %c0 = arith.constant 0 : index
    %c0_1 = arith.constant 0 : index
    %3 = vector.load %arg2[%c0, %c0_1] : memref<8x128xf32, #tpu.memory_space<vmem>>, vector<8x128xf32>
    %c0_2 = arith.constant 0 : index
    %c0_3 = arith.constant 0 : index
    %4 = vector.load %arg3[%c0_2, %c0_3] : memref<128x128xf32, #tpu.memory_space<vmem>>, vector<128x128xf32>
    %cst = arith.constant dense<0.000000e+00> : vector<8x128xf32>
    %5 = tpu.matmul %3, %4, %cst {dimension_numbers = #tpu.dot_dimension_numbers<[1], [0], [0], [1], [0, 0, 1, 1], [], []>} : vector<8x128xf32>, vector<128x128xf32>, vector<8x128xf32> -> vector<8x128xf32>
    %6 = arith.index_cast %arg1 : i32 to index
    %c0_4 = arith.constant 0 : index
    %7 = vector.load %arg4[%6, %c0_4] : memref<1x128xf32, #tpu.memory_space<vmem>>, vector<1x128xf32>
    %8 = vector.broadcast %7 : vector<1x128xf32> to vector<8x128xf32>
    %9 = arith.addf %5, %8 : vector<8x128xf32>
    %cst_5 = arith.constant 0.000000e+00 : f32
    %10 = vector.broadcast %cst_5 : f32 to vector<8x128xf32>
    %11 = arith.maximumf %9, %10 : vector<8x128xf32>
    %c0_6 = arith.constant 0 : index
    %c0_7 = arith.constant 0 : index
    %12 = vector.load %arg7[%c0_6, %c0_7] : memref<8x128xf32, #tpu.memory_space<vmem>>, vector<8x128xf32>
    %c0_8 = arith.constant 0 : index
    %c0_9 = arith.constant 0 : index
    %13 = vector.load %arg5[%c0_8, %c0_9] : memref<128x128xf32, #tpu.memory_space<vmem>>, vector<128x128xf32>
    %cst_10 = arith.constant dense<0.000000e+00> : vector<8x128xf32>
    %14 = tpu.matmul %11, %13, %cst_10 {dimension_numbers = #tpu.dot_dimension_numbers<[1], [0], [0], [1], [0, 0, 1, 1], [], []>} : vector<8x128xf32>, vector<128x128xf32>, vector<8x128xf32> -> vector<8x128xf32>
    %15 = arith.addf %12, %14 : vector<8x128xf32>
    %c0_11 = arith.constant 0 : index
    %c0_12 = arith.constant 0 : index
    %16 = vector.load %arg7[%c0_11, %c0_12] : memref<8x128xf32, #tpu.memory_space<vmem>>, vector<8x128xf32>
    tpu.vector_store %arg7[%c0_11, %c0_12], %15 {strides = array<i32>} : memref<8x128xf32, #tpu.memory_space<vmem>>, vector<8x128xf32>,
    %c0_i32_13 = arith.constant 0 : i32
    %17 = arith.cmpi eq, %arg1, %c0_i32_13 : i32
    %18 = arith.extui %17 : i1 to i32
    %c0_i32_14 = arith.constant 0 : i32
    %19 = arith.cmpi ne, %18, %c0_i32_14 : i32
    scf.if %19 {
      %c0_15 = arith.constant 0 : index
      %c0_16 = arith.constant 0 : index
      %20 = vector.load %arg7[%c0_15, %c0_16] : memref<8x128xf32, #tpu.memory_space<vmem>>, vector<8x128xf32>
      %c0_17 = arith.constant 0 : index
      %c0_18 = arith.constant 0 : index
      %21 = vector.load %arg6[%c0_17, %c0_18] : memref<1x128xf32, #tpu.memory_space<vmem>>, vector<1x128xf32>
      %22 = vector.broadcast %21 : vector<1x128xf32> to vector<8x128xf32>
      %23 = arith.addf %20, %22 : vector<8x128xf32>
      %c0_19 = arith.constant 0 : index
      %c0_20 = arith.constant 0 : index
      %24 = vector.load %arg7[%c0_19, %c0_20] : memref<8x128xf32, #tpu.memory_space<vmem>>, vector<8x128xf32>
      tpu.vector_store %arg7[%c0_19, %c0_20], %23 {strides = array<i32>} : memref<8x128xf32, #tpu.memory_space<vmem>>, vector<8x128xf32>,
    } else {
    }
    return
  }
  func.func @transform_0(%arg0: i32, %arg1: i32) -> (i32, i32) {
    %c0_i32 = arith.constant 0 : i32
    %c0_i32_0 = arith.constant 0 : i32
    return %arg0, %c0_i32 : i32, i32
  }
  func.func @transform_1(%arg0: i32, %arg1: i32) -> (i32, i32) {
    %c0_i32 = arith.constant 0 : i32
    %c0_i32_0 = arith.constant 0 : i32
    return %c0_i32, %arg1 : i32, i32
  }
  func.func @transform_2(%arg0: i32, %arg1: i32) -> (i32, i32) {
    %c0_i32 = arith.constant 0 : i32
    %c0_i32_0 = arith.constant 0 : i32
    %c0_i32_1 = arith.constant 0 : i32
    return %c0_i32, %c0_i32_0 : i32, i32
  }
  func.func @transform_3(%arg0: i32, %arg1: i32) -> (i32, i32) {
    %c0_i32 = arith.constant 0 : i32
    %c0_i32_0 = arith.constant 0 : i32
    return %arg1, %c0_i32 : i32, i32
  }
  func.func @transform_4(%arg0: i32, %arg1: i32) -> (i32, i32) {
    %c0_i32 = arith.constant 0 : i32
    %c0_i32_0 = arith.constant 0 : i32
    %c0_i32_1 = arith.constant 0 : i32
    return %c0_i32, %c0_i32_0 : i32, i32
  }
  func.func @transform_5(%arg0: i32, %arg1: i32) -> (i32, i32) {
    %c0_i32 = arith.constant 0 : i32
    %c0_i32_0 = arith.constant 0 : i32
    return %arg0, %c0_i32 : i32, i32
  }
}

</mosaic_0001>

<llo_original>
// kernel: tpu_custom_call.1
$region0: #{tpu_custom_call.1}
  #allocation0 [shape = 'u32[]', space=smem, size = 0x4, offset = 0x4, fixed_abs, tag = 'smem constant byte address 0x4 - core index']
  #allocation1 [shape = 'u32[144,128]{1,0:T(1,128)}', space=vmem, size = 0x12000, scoped, tag = 'internal scratch']
  %s0 = inlined_call_operand.hbm [shape: f32[16,128], index: 0, kind: input, shape index: {}]
  %s1 = inlined_call_operand.hbm [shape: f32[128,128], index: 1, kind: input, shape index: {}]
  %s2 = inlined_call_operand.vmem [shape: f32[1,128], index: 2, kind: input, shape index: {}]
  %s3 = inlined_call_operand.hbm [shape: f32[128,128], index: 3, kind: input, shape index: {}]
  %s4 = inlined_call_operand.vmem [shape: f32[1,128], index: 4, kind: input, shape index: {}]
  %s5 = inlined_call_operand.hbm [shape: f32[16,128], index: 5, kind: output, shape index: {}]
  %s6 = sld [smem:[#allocation0]]
  $region73: #{tpu_custom_call.1} parent=0
    _
  %s8 = ssub.s32 1, %s6
  %s9 = scalar_select 0, %s8, %s6
  $region1: #{tpu_custom_call.1} parent=0
    #allocation2 [shape = 'u8[8192]{0}', space=vmem, size = 0x2000, scoped, tag = 'input window, operand 0']
    #allocation3 [shape = 's32[2]{0}', space=sflag, size = 0x8, scoped, tag = 'scoped memory for tpu_custom_call.1']
    #allocation4 [shape = 's32[2]{0}', space=sflag, size = 0x8, scoped, tag = 'scoped memory for tpu_custom_call.1']
    #allocation5 [shape = 'u8[65536]{0}', space=vmem, size = 0x10000, scoped, tag = 'input window, operand 1, single buffered']
    #allocation6 [shape = 's32[1]{0}', space=sflag, size = 0x4, scoped, tag = 'scoped memory for tpu_custom_call.1']
    #allocation7 [shape = 'u8[65536]{0}', space=vmem, size = 0x10000, scoped, tag = 'input window, operand 3, single buffered']
    #allocation8 [shape = 'u8[8192]{0}', space=vmem, size = 0x2000, scoped, tag = 'output window, operand 0']
    %10 = vsyncpa [#allocation3], 0
    %s11 = scalar_lea.sflag [#allocation3], 1
    %12 = vsyncpa %s11, 0
    %13 = vsyncpa [#allocation6], 0
    %14 = vsyncpa [#allocation4], 0
    %s15 = scalar_lea.sflag [#allocation4], 1
    %16 = vsyncpa %s15, 0
    loop: start=0, step=1, limit=4
    $region2: #{tpu_custom_call.1} parent=1 // loop_pre_header
      _
    $region3: #{tpu_custom_call.1} parent=1 // loop_header
      %s18 = sphi 0, %s22
      %p19 = scmp.ge.s32.totalorder %s18, 4
      %s25 = sphi 0, %s37
      %s26 = sphi 0, %s33
      %s27 = sphi 0, %s25
      %s28 = sphi 0, %s26
      %s29 = sphi 0, %s27
      %s30 = sphi 0, %s28
      %s40 = sphi 0, %s42
      %s43 = sphi 0, %s40
      %s44 = sphi 0, %s43
      %s60 = sphi 0, %s44
      %s66 = sphi 0, %s68
      %s69 = sphi 0, %s66
      %s70 = sphi 0, %s69
      %s86 = sphi 0, %s70
      %s90 = sphi 0, %s90
      %s92 = sphi 0, %s90
      %s93 = sphi 0, %s92
      %s107 = sphi 0, %s93
      %s113 = sphi 0, %s115
      %s116 = sphi 0, %s113
      %s117 = sphi 0, %s116
      %s133 = sphi 0, %s117
      %s137 = sphi 0, %s137
      %s139 = sphi 0, %s137
      %s140 = sphi 0, %s139
      %s154 = sphi 0, %s140
      %s160 = sphi 0, %s162
      %s163 = sphi 0, %s160
      %s164 = sphi 0, %s163
      %s180 = sphi 0, %s164
    $region4: #{tpu_custom_call.1} parent=1 // loop_header_branch
      %21 = sbr.rel (%p19) target = $region8
    $region5: #{tpu_custom_call.1} parent=1 // loop_body
      %s23 = ssub.s32 %s18, 1
      %s24 = ssub.s32 %s18, 2
      %s31 = sadd.s32 1, %s26
      %p32 = scmp.ge.s32.totalorder %s31, 1
      %s33 = scalar_select %p32, 0, %s31
      %s34 = sadd.s32 1, %s25
      %s35 = scalar_select %p32, %s34, %s25
      %p36 = scmp.ge.s32.totalorder %s35, 2
      %s37 = scalar_select %p36, 0, %s35
      %s38 = ssub.s32 %s25, %s37
      %p39 = scmp.eq.s32.totalorder %s38, 0
      %s41 = sadd.s32 %s40, 1
      %s42 = scalar_select %p39, %s40, %s41
      %p45 = pneg %p39
      %p46 = scmp.eq.s32.totalorder %s18, 1
      %p47 = por %p45, %p46
      %p48 = scmp.ne.s32.totalorder %s40, %s43
      %p49 = scmp.eq.s32.totalorder %s18, 0
      %p50 = por %p48, %p49
      %p51 = scmp.ne.s32.totalorder %s40, %s43
      %p52 = scmp.eq.s32.totalorder %s23, 1
      %p53 = por %p51, %p52
      %p54 = scmp.ne.s32.totalorder %s43, %s44
      %p55 = scmp.eq.s32.totalorder %s23, 0
      %p56 = por %p54, %p55
      %p57 = scmp.ne.s32.totalorder %s43, %s44
      %p58 = scmp.eq.s32.totalorder %s24, 1
      %p59 = por %p57, %p58
      %p61 = scmp.ne.s32.totalorder %s44, %s60
      %p62 = scmp.eq.s32.totalorder %s24, 0
      %p63 = por %p61, %p62
      %s64 = ssub.s32 %s26, %s33
      %p65 = scmp.eq.s32.totalorder %s64, 0
      %s67 = sadd.s32 %s66, 1
      %s68 = scalar_select %p65, %s66, %s67
      %p71 = pneg %p65
      %p72 = scmp.eq.s32.totalorder %s18, 1
      %p73 = por %p71, %p72
      %p74 = scmp.ne.s32.totalorder %s66, %s69
      %p75 = scmp.eq.s32.totalorder %s18, 0
      %p76 = por %p74, %p75
      %p77 = scmp.ne.s32.totalorder %s66, %s69
      %p78 = scmp.eq.s32.totalorder %s23, 1
      %p79 = por %p77, %p78
      %p80 = scmp.ne.s32.totalorder %s69, %s70
      %p81 = scmp.eq.s32.totalorder %s23, 0
      %p82 = por %p80, %p81
      %p83 = scmp.ne.s32.totalorder %s69, %s70
      %p84 = scmp.eq.s32.totalorder %s24, 1
      %p85 = por %p83, %p84
      %p87 = scmp.ne.s32.totalorder %s70, %s86
      %p88 = scmp.eq.s32.totalorder %s24, 0
      %p89 = por %p87, %p88
      %s91 = sadd.s32 %s90, 1
      %p94 = scmp.eq.s32.totalorder %s18, 1
      %p95 = scmp.ne.s32.totalorder %s90, %s92
      %p96 = scmp.eq.s32.totalorder %s18, 0
      %p97 = por %p95, %p96
      %p98 = scmp.ne.s32.totalorder %s90, %s92
      %p99 = scmp.eq.s32.totalorder %s23, 1
      %p100 = por %p98, %p99
      %p101 = scmp.ne.s32.totalorder %s92, %s93
      %p102 = scmp.eq.s32.totalorder %s23, 0
      %p103 = por %p101, %p102
      %p104 = scmp.ne.s32.totalorder %s92, %s93
      %p105 = scmp.eq.s32.totalorder %s24, 1
      %p106 = por %p104, %p105
      %p108 = scmp.ne.s32.totalorder %s93, %s107
      %p109 = scmp.eq.s32.totalorder %s24, 0
      %p110 = por %p108, %p109
      %s111 = ssub.s32 %s26, %s33
      %p112 = scmp.eq.s32.totalorder %s111, 0
      %s114 = sadd.s32 %s113, 1
      %s115 = scalar_select %p112, %s113, %s114
      %p118 = pneg %p112
      %p119 = scmp.eq.s32.totalorder %s18, 1
      %p120 = por %p118, %p119
      %p121 = scmp.ne.s32.totalorder %s113, %s116
      %p122 = scmp.eq.s32.totalorder %s18, 0
      %p123 = por %p121, %p122
      %p124 = scmp.ne.s32.totalorder %s113, %s116
      %p125 = scmp.eq.s32.totalorder %s23, 1
      %p126 = por %p124, %p125
      %p127 = scmp.ne.s32.totalorder %s116, %s117
      %p128 = scmp.eq.s32.totalorder %s23, 0
      %p129 = por %p127, %p128
      %p130 = scmp.ne.s32.totalorder %s116, %s117
      %p131 = scmp.eq.s32.totalorder %s24, 1
      %p132 = por %p130, %p131
      %p134 = scmp.ne.s32.totalorder %s117, %s133
      %p135 = scmp.eq.s32.totalorder %s24, 0
      %p136 = por %p134, %p135
      %s138 = sadd.s32 %s137, 1
      %p141 = scmp.eq.s32.totalorder %s18, 1
      %p142 = scmp.ne.s32.totalorder %s137, %s139
      %p143 = scmp.eq.s32.totalorder %s18, 0
      %p144 = por %p142, %p143
      %p145 = scmp.ne.s32.totalorder %s137, %s139
      %p146 = scmp.eq.s32.totalorder %s23, 1
      %p147 = por %p145, %p146
      %p148 = scmp.ne.s32.totalorder %s139, %s140
      %p149 = scmp.eq.s32.totalorder %s23, 0
      %p150 = por %p148, %p149
      %p151 = scmp.ne.s32.totalorder %s139, %s140
      %p152 = scmp.eq.s32.totalorder %s24, 1
      %p153 = por %p151, %p152
      %p155 = scmp.ne.s32.totalorder %s140, %s154
      %p156 = scmp.eq.s32.totalorder %s24, 0
      %p157 = por %p155, %p156
      %s158 = ssub.s32 %s25, %s37
      %p159 = scmp.eq.s32.totalorder %s158, 0
      %s161 = sadd.s32 %s160, 1
      %s162 = scalar_select %p159, %s160, %s161
      %p165 = pneg %p159
      %p166 = scmp.eq.s32.totalorder %s18, 1
      %p167 = por %p165, %p166
      %p168 = scmp.ne.s32.totalorder %s160, %s163
      %p169 = scmp.eq.s32.totalorder %s18, 0
      %p170 = por %p168, %p169
      %p171 = scmp.ne.s32.totalorder %s160, %s163
      %p172 = scmp.eq.s32.totalorder %s23, 1
      %p173 = por %p171, %p172
      %p174 = scmp.ne.s32.totalorder %s163, %s164
      %p175 = scmp.eq.s32.totalorder %s23, 0
      %p176 = por %p174, %p175
      %p177 = scmp.ne.s32.totalorder %s163, %s164
      %p178 = scmp.eq.s32.totalorder %s24, 1
      %p179 = por %p177, %p178
      %p181 = scmp.ne.s32.totalorder %s164, %s180
      %p182 = scmp.eq.s32.totalorder %s24, 0
      %p183 = por %p181, %p182
      %p184 = scmp.le.s32.totalorder 1, %s18
      %p185 = scmp.lt.s32.totalorder %s18, 3
      %p186 = pnand %p184, %p185
      %p187 = pneg %p186
      // Predicated region
      $region9: #{tpu_custom_call.1} parent=5 // pred_check
        _
      $region10: #{tpu_custom_call.1} parent=5 // pred_check_branch
        %189 = sbr.rel (%p186) target = $region12
      $region11: #{tpu_custom_call.1} parent=5 // pred_region
        %s190 = ssub.s32 %s18, 1
        // Predicated region
        $region13: #{tpu_custom_call.1} parent=11 // pred_check
          %p191 = pneg %p82
        $region14: #{tpu_custom_call.1} parent=11 // pred_check_branch
          %193 = sbr.rel (%p191) target = $region16
        $region15: #{tpu_custom_call.1} parent=11 // pred_region
          %s195 = ssub.s32 2048, 2048
          %196 = vsyncadd [#allocation6], %s195
          %s197 = smul.addr %s28, 128
          %s198 = scalar_lea.hbm %s1, %s197
          %s199 = sshll.u32 [#allocation5], 4
          %s200 = int_to_ptr.vmem [resolvable:$true] %s199
          %205 = dma.hbm_to_vmem [thread:$0]  %s198, 2048, %s200, [#allocation6], 128, 128, 8
        $region16: #{tpu_custom_call.1} parent=11 // pred_fallthru
          _
        // Predicated region
        $region17: #{tpu_custom_call.1} parent=11 // pred_check
          %p206 = pneg %p103
        $region18: #{tpu_custom_call.1} parent=11 // pred_check_branch
          %208 = sbr.rel (%p206) target = $region20
        $region19: #{tpu_custom_call.1} parent=11 // pred_region
          _
        $region20: #{tpu_custom_call.1} parent=11 // pred_fallthru
          _
        // Predicated region
        $region21: #{tpu_custom_call.1} parent=11 // pred_check
          %p209 = pneg %p129
        $region22: #{tpu_custom_call.1} parent=11 // pred_check_branch
          %211 = sbr.rel (%p209) target = $region24
        $region23: #{tpu_custom_call.1} parent=11 // pred_region
          %s212 = smul.u32 16, %s28
          %s214 = ssub.s32 2048, 2048
          %215 = vsyncadd [#allocation6], %s214
          %s216 = smul.addr %s212, 128
          %s217 = scalar_lea.hbm %s3, %s216
          %s218 = sshll.u32 [#allocation7], 4
          %s219 = int_to_ptr.vmem [resolvable:$true] %s218
          %224 = dma.hbm_to_vmem [thread:$0]  %s217, 2048, %s219, [#allocation6], 128, 128, 8
        $region24: #{tpu_custom_call.1} parent=11 // pred_fallthru
          _
        // Predicated region
        $region25: #{tpu_custom_call.1} parent=11 // pred_check
          %p225 = pneg %p150
        $region26: #{tpu_custom_call.1} parent=11 // pred_check_branch
          %227 = sbr.rel (%p225) target = $region28
        $region27: #{tpu_custom_call.1} parent=11 // pred_region
          _
        $region28: #{tpu_custom_call.1} parent=11 // pred_fallthru
          _
      $region12: #{tpu_custom_call.1} parent=5 // pred_fallthru
        _
      %p228 = scmp.lt.s32.totalorder %s18, 2
      // Predicated region
      $region29: #{tpu_custom_call.1} parent=5 // pred_check
        %p229 = pneg %p228
      $region30: #{tpu_custom_call.1} parent=5 // pred_check_branch
        %231 = sbr.rel (%p229) target = $region32
      $region31: #{tpu_custom_call.1} parent=5 // pred_region
        // Predicated region
        $region33: #{tpu_custom_call.1} parent=31 // pred_check
          %p232 = pneg %p50
        $region34: #{tpu_custom_call.1} parent=31 // pred_check_branch
          %234 = sbr.rel (%p232) target = $region36
        $region35: #{tpu_custom_call.1} parent=31 // pred_region
          %s235 = sand.u32 %s40, 1
          %s236 = scalar_lea.sflag [#allocation3], %s235
          %s237 = sand.u32 %s40, 1
          %s238 = smul.addr %s237, 8
          %s239 = scalar_lea.vmem [#allocation2], %s238
          %s241 = ssub.s32 128, 128
          %242 = vsyncadd %s236, %s241
          %s243 = smul.addr %s25, 128
          %s244 = scalar_lea.hbm %s0, %s243
          %s246 = sshll.u32 %s239, 4
          %s247 = int_to_ptr.vmem [resolvable:$true] %s246
          %249 = dma.hbm_to_vmem [thread:$0]  %s244, 128, %s247, %s236
        $region36: #{tpu_custom_call.1} parent=31 // pred_fallthru
          _
      $region32: #{tpu_custom_call.1} parent=5 // pred_fallthru
        _
      %p250 = scmp.le.s32.totalorder 1, %s18
      %p251 = scmp.lt.s32.totalorder %s18, 3
      %p252 = pnand %p250, %p251
      %p253 = pneg %p252
      // Predicated region
      $region37: #{tpu_custom_call.1} parent=5 // pred_check
        _
      $region38: #{tpu_custom_call.1} parent=5 // pred_check_branch
        %255 = sbr.rel (%p252) target = $region40
      $region39: #{tpu_custom_call.1} parent=5 // pred_region
        %s256 = ssub.s32 %s18, 1
        %s257 = sand.u32 %s43, 1
        %s258 = scalar_lea.sflag [#allocation3], %s257
        %s259 = sand.u32 %s43, 1
        %s260 = smul.addr %s259, 8
        %s261 = scalar_lea.vmem [#allocation2], %s260
        // Predicated region
        $region41: #{tpu_custom_call.1} parent=39 // pred_check
          %p262 = pneg %p56
        $region42: #{tpu_custom_call.1} parent=39 // pred_check_branch
          %264 = sbr.rel (%p262) target = $region44
        $region43: #{tpu_custom_call.1} parent=39 // pred_region
          %265 = dma.done %s258, 128
        $region44: #{tpu_custom_call.1} parent=39 // pred_fallthru
          _
        // Predicated region
        $region45: #{tpu_custom_call.1} parent=39 // pred_check
          %p266 = pneg %p82
        $region46: #{tpu_custom_call.1} parent=39 // pred_check_branch
          %268 = sbr.rel (%p266) target = $region48
        $region47: #{tpu_custom_call.1} parent=39 // pred_region
          %269 = dma.done [#allocation6], 2048
        $region48: #{tpu_custom_call.1} parent=39 // pred_fallthru
          _
        // Predicated region
        $region49: #{tpu_custom_call.1} parent=39 // pred_check
          %p270 = pneg %p129
        $region50: #{tpu_custom_call.1} parent=39 // pred_check_branch
          %272 = sbr.rel (%p270) target = $region52
        $region51: #{tpu_custom_call.1} parent=39 // pred_region
          %273 = dma.done [#allocation6], 2048
        $region52: #{tpu_custom_call.1} parent=39 // pred_fallthru
          _
        %s274 = sand.u32 %s43, 1
        %s275 = scalar_lea.sflag [#allocation3], %s274
        %s276 = sand.u32 %s43, 1
        %s277 = smul.addr %s276, 8
        %s278 = scalar_lea.vmem [#allocation2], %s277
        %p279 = pneg %p56
        %p280 = pneg %p53
        %p281 = pneg %p82
        %p282 = pneg %p79
        %p283 = pneg %p103
        %p284 = pneg %p100
        %p285 = pneg %p129
        %p286 = pneg %p126
        %p287 = pneg %p150
        %p288 = pneg %p147
        %p289 = pneg %p176
        %p290 = pneg %p173
        %s291 = sand.u32 %s163, 1
        %s292 = scalar_lea.sflag [#allocation4], %s291
        %s293 = sand.u32 %s163, 1
        %s294 = smul.addr %s293, 8
        %s295 = scalar_lea.vmem [#allocation8], %s294
        %s296 = smul.u32 16, %s28
        %p297 = scmp.eq.s32.totalorder %s28, 0
        // Predicated region
        $region53: #{tpu_custom_call.1} parent=39 // pred_check
          %p298 = pneg %p297
        $region54: #{tpu_custom_call.1} parent=39 // pred_check_branch
          %300 = sbr.rel (%p298) target = $region56
        $region55: #{tpu_custom_call.1} parent=39 // pred_region
          %301 = vst [vmem:[%s295] sm:$0xff] 0.0
        $region56: #{tpu_custom_call.1} parent=39 // pred_fallthru
          _
        %v302 = vld [vmem:[%s261] sm:$0xff]
        %v303 = vld [vmem:[#allocation5] sm:$0xff]
        %v304 = vld [vmem:[#allocation5 + $0x8] sm:$0xff]
        %v305 = vld [vmem:[#allocation5 + $0x10] sm:$0xff]
        %v306 = vld [vmem:[#allocation5 + $0x18] sm:$0xff]
        %v307 = vld [vmem:[#allocation5 + $0x20] sm:$0xff]
        %v308 = vld [vmem:[#allocation5 + $0x28] sm:$0xff]
        %v309 = vld [vmem:[#allocation5 + $0x30] sm:$0xff]
        %v310 = vld [vmem:[#allocation5 + $0x38] sm:$0xff]
        %v311 = vld [vmem:[#allocation5 + $0x40] sm:$0xff]
        %v312 = vld [vmem:[#allocation5 + $0x48] sm:$0xff]
        %v313 = vld [vmem:[#allocation5 + $0x50] sm:$0xff]
        %v314 = vld [vmem:[#allocation5 + $0x58] sm:$0xff]
        %v315 = vld [vmem:[#allocation5 + $0x60] sm:$0xff]
        %v316 = vld [vmem:[#allocation5 + $0x68] sm:$0xff]
        %v317 = vld [vmem:[#allocation5 + $0x70] sm:$0xff]
        %v318 = vld [vmem:[#allocation5 + $0x78] sm:$0xff]
        %s319 = scalar_lea.vmem %s2, %s28
        %v320 = vld [vmem:[%s319] sm:$0x1]
        %v322 = vlaneseq
        %v323 = vshrl.u32 %v322, 7
        %v324 = vsub.s32 0, %v323
        %v325 = vrot.slane %v320, %v324
        %327 = vmatprep.subr.mxu0 0.0
        %328 = vmatpush1.msra.mxu0 %v303
        %329 = vmatprep.subr.mxu0 0.0
        %330 = vmatpush1.msra.mxu0 %v304
        %331 = vmatprep.subr.mxu0 0.0
        %332 = vmatpush1.msra.mxu0 %v305
        %333 = vmatprep.subr.mxu0 0.0
        %334 = vmatpush1.msra.mxu0 %v306
        %335 = vmatprep.subr.mxu0 0.0
        %336 = vmatpush1.msra.mxu0 %v307
        %337 = vmatprep.subr.mxu0 0.0
        %338 = vmatpush1.msra.mxu0 %v308
        %339 = vmatprep.subr.mxu0 0.0
        %340 = vmatpush1.msra.mxu0 %v309
        %341 = vmatprep.subr.mxu0 0.0
        %342 = vmatpush1.msra.mxu0 %v310
        %343 = vmatprep.subr.mxu0 0.0
        %344 = vmatpush1.msra.mxu0 %v311
        %345 = vmatprep.subr.mxu0 0.0
        %346 = vmatpush1.msra.mxu0 %v312
        %347 = vmatprep.subr.mxu0 0.0
        %348 = vmatpush1.msra.mxu0 %v313
        %349 = vmatprep.subr.mxu0 0.0
        %350 = vmatpush1.msra.mxu0 %v314
        %351 = vmatprep.subr.mxu0 0.0
        %352 = vmatpush1.msra.mxu0 %v315
        %353 = vmatprep.subr.mxu0 0.0
        %354 = vmatpush1.msra.mxu0 %v316
        %355 = vmatprep.subr.mxu0 0.0
        %356 = vmatpush1.msra.mxu0 %v317
        %357 = vmatprep.subr.mxu0 0.0
        %358 = vmatpush1.msra.mxu0 %v318
        %359 = vmatprep.subr.mxu0 0.0
        %360 = vmatpush1.msra.mxu0 0.0
        %361 = vmatprep.subr.mxu0 0.0
        %362 = vmatpush1.msra.mxu0 0.0
        %363 = vmatprep.subr.mxu0 0.0
        %364 = vmatpush1.msra.mxu0 0.0
        %365 = vmatprep.subr.mxu0 0.0
        %366 = vmatpush1.msra.mxu0 0.0
        %367 = vmatprep.subr.mxu0 0.0
        %368 = vmatpush1.msra.mxu0 0.0
        %369 = vmatprep.subr.mxu0 0.0
        %370 = vmatpush1.msra.mxu0 0.0
        %371 = vmatprep.subr.mxu0 0.0
        %372 = vmatpush1.msra.mxu0 0.0
        %373 = vmatprep.subr.mxu0 0.0
        %374 = vmatpush1.msra.mxu0 0.0
        %375 = vmatprep.subr.mxu0 0.0
        %376 = vmatpush1.msra.mxu0 0.0
        %377 = vmatprep.subr.mxu0 0.0
        %378 = vmatpush1.msra.mxu0 0.0
        %379 = vmatprep.subr.mxu0 0.0
        %380 = vmatpush1.msra.mxu0 0.0
        %381 = vmatprep.subr.mxu0 0.0
        %382 = vmatpush1.msra.mxu0 0.0
        %383 = vmatprep.subr.mxu0 0.0
        %384 = vmatpush1.msra.mxu0 0.0
        %385 = vmatprep.subr.mxu0 0.0
        %386 = vmatpush1.msra.mxu0 0.0
        %387 = vmatprep.subr.mxu0 0.0
        %388 = vmatpush1.msra.mxu0 0.0
        %389 = vmatprep.subr.mxu0 0.0
        %390 = vmatpush1.msra.mxu0 0.0
        %391 = vmatprep.mubr.f32.mxu0 0.0
        %392 = vmatmul.mubr.f32.gmra.mrb[0].mxu0 %v302
        %v393 = vpop.f32.mrb[0].mxu0
        %v394 = vadd.f32 %v325, %v393
        %v395 = vpop.f32.mrb[0].mxu0
        %396 = vdwg.mxu0
        %v397 = vmax.f32 %v394, 0.0
        %v398 = vld [vmem:[%s295] sm:$0xff]
        %v399 = vld [vmem:[#allocation7] sm:$0xff]
        %v400 = vld [vmem:[#allocation7 + $0x8] sm:$0xff]
        %v401 = vld [vmem:[#allocation7 + $0x10] sm:$0xff]
        %v402 = vld [vmem:[#allocation7 + $0x18] sm:$0xff]
        %v403 = vld [vmem:[#allocation7 + $0x20] sm:$0xff]
        %v404 = vld [vmem:[#allocation7 + $0x28] sm:$0xff]
        %v405 = vld [vmem:[#allocation7 + $0x30] sm:$0xff]
        %v406 = vld [vmem:[#allocation7 + $0x38] sm:$0xff]
        %v407 = vld [vmem:[#allocation7 + $0x40] sm:$0xff]
        %v408 = vld [vmem:[#allocation7 + $0x48] sm:$0xff]
        %v409 = vld [vmem:[#allocation7 + $0x50] sm:$0xff]
        %v410 = vld [vmem:[#allocation7 + $0x58] sm:$0xff]
        %v411 = vld [vmem:[#allocation7 + $0x60] sm:$0xff]
        %v412 = vld [vmem:[#allocation7 + $0x68] sm:$0xff]
        %v413 = vld [vmem:[#allocation7 + $0x70] sm:$0xff]
        %v414 = vld [vmem:[#allocation7 + $0x78] sm:$0xff]
        %415 = vmatprep.subr.mxu0 0.0
        %416 = vmatpush1.msra.mxu0 %v399
        %417 = vmatprep.subr.mxu0 0.0
        %418 = vmatpush1.msra.mxu0 %v400
        %419 = vmatprep.subr.mxu0 0.0
        %420 = vmatpush1.msra.mxu0 %v401
        %421 = vmatprep.subr.mxu0 0.0
        %422 = vmatpush1.msra.mxu0 %v402
        %423 = vmatprep.subr.mxu0 0.0
        %424 = vmatpush1.msra.mxu0 %v403
        %425 = vmatprep.subr.mxu0 0.0
        %426 = vmatpush1.msra.mxu0 %v404
        %427 = vmatprep.subr.mxu0 0.0
        %428 = vmatpush1.msra.mxu0 %v405
        %429 = vmatprep.subr.mxu0 0.0
        %430 = vmatpush1.msra.mxu0 %v406
        %431 = vmatprep.subr.mxu0 0.0
        %432 = vmatpush1.msra.mxu0 %v407
        %433 = vmatprep.subr.mxu0 0.0
        %434 = vmatpush1.msra.mxu0 %v408
        %435 = vmatprep.subr.mxu0 0.0
        %436 = vmatpush1.msra.mxu0 %v409
        %437 = vmatprep.subr.mxu0 0.0
        %438 = vmatpush1.msra.mxu0 %v410
        %439 = vmatprep.subr.mxu0 0.0
        %440 = vmatpush1.msra.mxu0 %v411
        %441 = vmatprep.subr.mxu0 0.0
        %442 = vmatpush1.msra.mxu0 %v412
        %443 = vmatprep.subr.mxu0 0.0
        %444 = vmatpush1.msra.mxu0 %v413
        %445 = vmatprep.subr.mxu0 0.0
        %446 = vmatpush1.msra.mxu0 %v414
        %447 = vmatprep.subr.mxu0 0.0
        %448 = vmatpush1.msra.mxu0 0.0
        %449 = vmatprep.subr.mxu0 0.0
        %450 = vmatpush1.msra.mxu0 0.0
        %451 = vmatprep.subr.mxu0 0.0
        %452 = vmatpush1.msra.mxu0 0.0
        %453 = vmatprep.subr.mxu0 0.0
        %454 = vmatpush1.msra.mxu0 0.0
        %455 = vmatprep.subr.mxu0 0.0
        %456 = vmatpush1.msra.mxu0 0.0
        %457 = vmatprep.subr.mxu0 0.0
        %458 = vmatpush1.msra.mxu0 0.0
        %459 = vmatprep.subr.mxu0 0.0
        %460 = vmatpush1.msra.mxu0 0.0
        %461 = vmatprep.subr.mxu0 0.0
        %462 = vmatpush1.msra.mxu0 0.0
        %463 = vmatprep.subr.mxu0 0.0
        %464 = vmatpush1.msra.mxu0 0.0
        %465 = vmatprep.subr.mxu0 0.0
        %466 = vmatpush1.msra.mxu0 0.0
        %467 = vmatprep.subr.mxu0 0.0
        %468 = vmatpush1.msra.mxu0 0.0
        %469 = vmatprep.subr.mxu0 0.0
        %470 = vmatpush1.msra.mxu0 0.0
        %471 = vmatprep.subr.mxu0 0.0
        %472 = vmatpush1.msra.mxu0 0.0
        %473 = vmatprep.subr.mxu0 0.0
        %474 = vmatpush1.msra.mxu0 0.0
        %475 = vmatprep.subr.mxu0 0.0
        %476 = vmatpush1.msra.mxu0 0.0
        %477 = vmatprep.subr.mxu0 0.0
        %478 = vmatpush1.msra.mxu0 0.0
        %479 = vmatprep.mubr.f32.mxu0 0.0
        %480 = vmatmul.mubr.f32.gmra.mrb[0].mxu0 %v397
        %v481 = vpop.f32.mrb[0].mxu0
        %v482 = vadd.f32 0.0, %v481
        %v483 = vpop.f32.mrb[0].mxu0
        %484 = vdwg.mxu0
        %v485 = vadd.f32 %v398, %v482
        %486 = vst [vmem:[%s295] sm:$0xff] %v485
        // Predicated region
        $region57: #{tpu_custom_call.1} parent=39 // pred_check
          %p487 = pneg %p297
        $region58: #{tpu_custom_call.1} parent=39 // pred_check_branch
          %489 = sbr.rel (%p487) target = $region60
        $region59: #{tpu_custom_call.1} parent=39 // pred_region
          %v490 = vld [vmem:[%s295] sm:$0xff]
          %v491 = vld [vmem:[%s4] sm:$0x1]
          %v493 = vlaneseq
          %v494 = vshrl.u32 %v493, 7
          %v495 = vsub.s32 0, %v494
          %v496 = vrot.slane %v491, %v495
          %v498 = vadd.f32 %v490, %v496
          %499 = vst [vmem:[%s295] sm:$0xff] %v498
        $region60: #{tpu_custom_call.1} parent=39 // pred_fallthru
          _
        %s500 = sand.u32 %s163, 1
        %s501 = scalar_lea.sflag [#allocation4], %s500
        %s502 = sand.u32 %s163, 1
        %s503 = smul.addr %s502, 8
        %s504 = scalar_lea.vmem [#allocation8], %s503
        // Predicated region
        $region61: #{tpu_custom_call.1} parent=39 // pred_check
          %p505 = pneg %p173
        $region62: #{tpu_custom_call.1} parent=39 // pred_check_branch
          %507 = sbr.rel (%p505) target = $region64
        $region63: #{tpu_custom_call.1} parent=39 // pred_region
          %s509 = ssub.s32 128, 128
          %510 = vsyncadd %s501, %s509
          %s511 = smul.addr %s27, 128
          %s512 = scalar_lea.hbm %s5, %s511
          %s514 = sshll.u32 %s504, 4
          %s515 = int_to_ptr.vmem [resolvable:$true] %s514
          %517 = dma.vmem_to_hbm [thread:$0]  %s515, 128, %s512, %s501
        $region64: #{tpu_custom_call.1} parent=39 // pred_fallthru
          _
      $region40: #{tpu_custom_call.1} parent=5 // pred_fallthru
        _
      %p518 = scmp.le.s32.totalorder 2, %s18
      // Predicated region
      $region65: #{tpu_custom_call.1} parent=5 // pred_check
        %p519 = pneg %p518
      $region66: #{tpu_custom_call.1} parent=5 // pred_check_branch
        %521 = sbr.rel (%p519) target = $region68
      $region67: #{tpu_custom_call.1} parent=5 // pred_region
        %s522 = ssub.s32 %s18, 2
        // Predicated region
        $region69: #{tpu_custom_call.1} parent=67 // pred_check
          %p523 = pneg %p179
        $region70: #{tpu_custom_call.1} parent=67 // pred_check_branch
          %525 = sbr.rel (%p523) target = $region72
        $region71: #{tpu_custom_call.1} parent=67 // pred_region
          %s526 = sand.u32 %s164, 1
          %s527 = scalar_lea.sflag [#allocation4], %s526
          %s528 = sand.u32 %s164, 1
          %s529 = smul.addr %s528, 8
          %s530 = scalar_lea.vmem [#allocation8], %s529
          %531 = dma.done %s527, 128
        $region72: #{tpu_custom_call.1} parent=67 // pred_fallthru
          _
      $region68: #{tpu_custom_call.1} parent=5 // pred_fallthru
        _
    $region6: #{tpu_custom_call.1} parent=1 // loop_footer
      %s22 = sadd.s32 1, %s18
    $region7: #{tpu_custom_call.1} parent=1 // loop_footer_branch
      %17 = sbr.rel target = $region3
    $region8: #{tpu_custom_call.1} parent=1 // loop_exit
      _
    %532 = vsyncpa [#allocation3], 1
    %s533 = scalar_lea.sflag [#allocation3], 1
    %534 = vsyncpa %s533, 1
    %535 = vsyncpa [#allocation6], 1
    %536 = vsyncpa [#allocation4], 1
    %s537 = scalar_lea.sflag [#allocation4], 1
    %538 = vsyncpa %s537, 1

</llo_original>
